<compile_context>
chip_gen: v7x
topology: tpu7x:2x2x1
jax: 0.10.0
libtpu: 0.0.40
codegen_flags: <defaults>
</compile_context>

<pallas_src>
import jax
import jax.numpy as jnp
from jax.experimental import pallas as pl
from jax.experimental.pallas import tpu as pltpu


def _round_up(x, m):
    return ((x + m - 1) // m) * m


def _num_tensorcores():
    """Best-effort count of TensorCores that share this kernel (megacore)."""
    try:
        info = pltpu.get_tpu_info()
    except Exception:
        return 1
    for attr in ("num_cores", "core_count", "num_tensorcores", "cores_per_chip"):
        v = getattr(info, attr, None)
        if isinstance(v, int) and v >= 1:
            return v
    return 1


def _head_kernel(cls_ref, w1_ref, b1_ref, w2_ref, b2_ref, out_ref):
    # cls_ref: [TB, H]  CLS-token embeddings (sliced either via BlockSpec over
    #                   the [B, S*H] view, or in the wrapper fallback)
    # w1_ref:  [H, P], b1_ref: [1, P]          pre_classifier
    # w2_ref:  [P, C_pad], b2_ref: [1, C_pad]  classifier (lane-padded)
    # out_ref: [TB, C_pad]
    cls = cls_ref[...]

    # pre_classifier: MXU matmul with f32 accumulation.  Activations are cast
    # to the weight dtype (no-op for f32 weights; bf16 MXU path otherwise --
    # inputs are rounded but accumulation stays f32).
    x = jnp.dot(cls.astype(w1_ref.dtype), w1_ref[...],
                preferred_element_type=jnp.float32)
    # Bias + ReLU in f32 on the VPU (v5e has no native bf16 VPU).
    x = jnp.maximum(x + b1_ref[...], 0.0)

    # TODO(synk): dropout is identity at inference; no RNG/mask applied here.

    # classifier
    y = jnp.dot(x.astype(w2_ref.dtype), w2_ref[...],
                preferred_element_type=jnp.float32)
    y = y + b2_ref[...]

    out_ref[...] = y.astype(out_ref.dtype)


def custom_transformer_head(last_hidden_state, w1, b1, w2, b2,
                            *, block_b=512, weight_dtype=jnp.bfloat16):
    """Pallas implementation of the CustomTransformerModel classifier head.

    last_hidden_state: [B, S, H] float32 (output of base_model)
    w1: [H, P], b1: [P]   -- pre_classifier  (stored transposed, [in, out])
    w2: [P, C], b2: [C]   -- classifier      (stored transposed, [in, out])
    weight_dtype: dtype for the matmul weights (default bf16; pass jnp.float32
                  for exact-f32 matmuls).  Accumulation is always f32.
    returns: [B, C] float32 logits
    """
    B, S, H = last_hidden_state.shape
    P = w1.shape[1]
    C = w2.shape[1]

    if weight_dtype is not None:
        w1 = w1.astype(weight_dtype)
        w2 = w2.astype(weight_dtype)

    # Lane-dense output: pad the classifier width to a multiple of 128 lanes so
    # the output store is an unmasked vst; slice back to C after the call.
    C_pad = _round_up(C, 128)
    if C_pad != C:
        w2 = jnp.pad(w2, ((0, 0), (0, C_pad - C)))
        b2 = jnp.pad(b2, (0, C_pad - C))

    # Keep biases 2-D [1, N] f32 VMEM tiles (cheap sublane-stride-0 broadcast).
    b1_2d = b1.reshape(1, P).astype(jnp.float32)
    b2_2d = b2.reshape(1, C_pad).astype(jnp.float32)

    # ---- batch tile size ----------------------------------------------------
    n_cores = _num_tensorcores()
    TB = min(block_b, B)
    if n_cores >= 2 and B >= 16:
        # Make sure the "parallel" batch axis has >= n_cores grid steps so a
        # megacore chip (v7x: 2 TCs) actually shards the batch.
        TB = min(TB, _round_up(pl.cdiv(B, n_cores), 8))
    if TB >= B:
        TB = B                               # full-extent block: always legal
    else:
        TB = max(8, (TB // 8) * 8)           # (8,128) rule: multiple of 8
        if TB >= B:
            TB = B
    grid = (pl.cdiv(B, TB),)

    # ---- CLS extraction -----------------------------------------------------
    # Lane-aligned H: fold the CLS slice into the BlockSpec over a
    # metadata-only [B, S*H] view -- only the first H lanes of each row (the
    # CLS token) are DMA'd and the wrapper-side slice fusion disappears.
    if H % 128 == 0:
        cls_in = last_hidden_state.reshape(B, S * H)
    else:
        cls_in = last_hidden_state[:, 0, :]  # [B, H] fallback (small H)
    # Same spec works for both inputs: block (TB, H) starting at column 0.
    # (If the per-step CLS DMA is exposed on v5e, pipeline_mode=pl.Buffered(3)
    #  here deepens the prefetch.)
    cls_spec = pl.BlockSpec((TB, H), lambda i: (i, 0))

    # ---- resident weights / VMEM guard -------------------------------------
    w_itemsize = jnp.dtype(w1.dtype).itemsize
    weight_bytes = (H * P + P * C_pad) * w_itemsize
    weight_kwargs = {}
    if weight_bytes > (8 << 20):
        # Constant-index weights don't need double-buffering; halving their
        # footprint matters on v7x's 64 MiB VMEM for H=P >= 2048 in f32.
        weight_kwargs = dict(pipeline_mode=pl.Buffered(1))

    w1_spec = pl.BlockSpec((H, P), lambda i: (0, 0), **weight_kwargs)
    b1_spec = pl.BlockSpec((1, P), lambda i: (0, 0))
    w2_spec = pl.BlockSpec((P, C_pad), lambda i: (0, 0), **weight_kwargs)
    b2_spec = pl.BlockSpec((1, C_pad), lambda i: (0, 0))

    w_bufs = 1 if weight_kwargs else 2
    vmem_est = (w_bufs * weight_bytes
                + 2 * TB * H * last_hidden_state.dtype.itemsize   # CLS tiles
                + 2 * TB * C_pad * 4                              # out tiles
                + TB * P * 4                                      # intermediate
                + 2 * (P + C_pad) * 4)                            # biases
    compiler_kwargs = dict(dimension_semantics=("parallel",))
    if vmem_est > (30 << 20):
        compiler_kwargs["vmem_limit_bytes"] = min(int(vmem_est * 1.25), 60 << 20)

    out_padded = pl.pallas_call(
        _head_kernel,
        out_shape=jax.ShapeDtypeStruct((B, C_pad), jnp.float32),
        grid_spec=pltpu.PrefetchScalarGridSpec(
            num_scalar_prefetch=0,
            grid=grid,
            in_specs=[cls_spec, w1_spec, b1_spec, w2_spec, b2_spec],
            out_specs=pl.BlockSpec((TB, C_pad), lambda i: (i, 0)),
        ),
        compiler_params=pltpu.CompilerParams(**compiler_kwargs),
    )(cls_in, w1, b1_2d, w2, b2_2d)

    return out_padded[:, :C]


def reference_head(last_hidden_state, w1, b1, w2, b2):
    cls = last_hidden_state[:, 0, :]
    x = jnp.maximum(cls @ w1 + b1, 0.0)
    return x @ w2 + b2


if __name__ == "__main__":
    key = jax.random.PRNGKey(0)

    # ---- Test 1: module-consistent small shapes (fallback CLS path) --------
    #   batch B=2, seq S=8, hidden H=32, pre-classifier P=32, classes C=4.
    B, S, H, P, C = 2, 8, 32, 32, 4
    k_hs, k_w1, k_b1, k_w2, k_b2, k2 = jax.random.split(key, 6)

    last_hidden_state = jax.random.normal(k_hs, (B, S, H), dtype=jnp.float32)
    w1 = jax.random.normal(k_w1, (H, P), dtype=jnp.float32) * 0.05
    b1 = jax.random.normal(k_b1, (P,), dtype=jnp.float32) * 0.05
    w2 = jax.random.normal(k_w2, (P, C), dtype=jnp.float32) * 0.05
    b2 = jax.random.normal(k_b2, (C,), dtype=jnp.float32) * 0.05

    ref = reference_head(last_hidden_state, w1, b1, w2, b2)

    # Exact-f32 run: must match the f32 reference tightly.
    out = custom_transformer_head(last_hidden_state, w1, b1, w2, b2,
                                  weight_dtype=jnp.float32)
    out = jax.block_until_ready(out)
    assert out.shape == (B, C)
    assert jnp.allclose(out, ref, atol=1e-5, rtol=1e-5), "f32 mismatch vs reference"

    # Default (bf16-weight) run: loose tolerance vs f32 reference.
    out_bf16 = custom_transformer_head(last_hidden_state, w1, b1, w2, b2)
    out_bf16 = jax.block_until_ready(out_bf16)
    assert out_bf16.shape == (B, C)
    assert jnp.allclose(out_bf16, ref, atol=1e-2, rtol=1e-2), "bf16 mismatch vs reference"

    # ---- Test 2: lane-aligned H -> fused CLS BlockSpec + multi-step grid ----
    B2, S2, H2, P2, C2 = 16, 4, 128, 128, 4
    k_hs2, k_w12, k_b12, k_w22, k_b22 = jax.random.split(k2, 5)
    hs2 = jax.random.normal(k_hs2, (B2, S2, H2), dtype=jnp.float32)
    w12 = jax.random.normal(k_w12, (H2, P2), dtype=jnp.float32) * 0.05
    b12 = jax.random.normal(k_b12, (P2,), dtype=jnp.float32) * 0.05
    w22 = jax.random.normal(k_w22, (P2, C2), dtype=jnp.float32) * 0.05
    b22 = jax.random.normal(k_b22, (C2,), dtype=jnp.float32) * 0.05

    ref2 = reference_head(hs2, w12, b12, w22, b22)
    out2 = custom_transformer_head(hs2, w12, b12, w22, b22,
                                   block_b=8, weight_dtype=jnp.float32)
    out2 = jax.block_until_ready(out2)
    assert out2.shape == (B2, C2)
    assert jnp.allclose(out2, ref2, atol=1e-5, rtol=1e-5), "fused-CLS path mismatch"

    print("KERNEL_OK")
</pallas_src>

<mosaic_0001>
module attributes {stable_mosaic.version = 11 : i64} {
  func.func @_head_kernel(%arg0: i32, %arg1: memref<2x32xf32, #tpu.memory_space<vmem>>, %arg2: memref<32x32xf32, #tpu.memory_space<vmem>>, %arg3: memref<1x32xf32, #tpu.memory_space<vmem>>, %arg4: memref<32x128xf32, #tpu.memory_space<vmem>>, %arg5: memref<1x128xf32, #tpu.memory_space<vmem>>, %arg6: memref<2x128xf32, #tpu.memory_space<vmem>>) attributes {dimension_semantics = [#tpu.dimension_semantics<parallel>], iteration_bounds = array<i64: 1>, scalar_prefetch = 0 : i64, scratch_operands = 0 : i64, tpu.core_type = #tpu.core_type<tc>, window_params = [{transform_indices = @transform_0, window_bounds = array<i64: 2, 32>}, {pipeline_mode = #tpu.pipeline_mode<synchronous>, transform_indices = @transform_1, window_bounds = array<i64: 32, 32>}, {pipeline_mode = #tpu.pipeline_mode<synchronous>, transform_indices = @transform_2, window_bounds = array<i64: 1, 32>}, {pipeline_mode = #tpu.pipeline_mode<synchronous>, transform_indices = @transform_3, window_bounds = array<i64: 32, 128>}, {pipeline_mode = #tpu.pipeline_mode<synchronous>, transform_indices = @transform_4, window_bounds = array<i64: 1, 128>}, {transform_indices = @transform_5, window_bounds = array<i64: 2, 128>}]} {
    %c0 = arith.constant 0 : index
    %c0_0 = arith.constant 0 : index
    %0 = vector.load %arg1[%c0, %c0_0] : memref<2x32xf32, #tpu.memory_space<vmem>>, vector<2x32xf32>
    %c0_1 = arith.constant 0 : index
    %c0_2 = arith.constant 0 : index
    %1 = vector.load %arg2[%c0_1, %c0_2] : memref<32x32xf32, #tpu.memory_space<vmem>>, vector<32x32xf32>
    %cst = arith.constant dense<0.000000e+00> : vector<2x32xf32>
    %2 = tpu.matmul %0, %1, %cst {dimension_numbers = #tpu.dot_dimension_numbers<[1], [0], [0], [1], [0, 0, 1, 1], [], []>} : vector<2x32xf32>, vector<32x32xf32>, vector<2x32xf32> -> vector<2x32xf32>
    %c0_3 = arith.constant 0 : index
    %c0_4 = arith.constant 0 : index
    %3 = vector.load %arg3[%c0_3, %c0_4] : memref<1x32xf32, #tpu.memory_space<vmem>>, vector<1x32xf32>
    %4 = vector.broadcast %3 : vector<1x32xf32> to vector<2x32xf32>
    %5 = arith.addf %2, %4 : vector<2x32xf32>
    %cst_5 = arith.constant 0.000000e+00 : f32
    %6 = vector.broadcast %cst_5 : f32 to vector<2x32xf32>
    %7 = arith.maximumf %5, %6 : vector<2x32xf32>
    %c0_6 = arith.constant 0 : index
    %c0_7 = arith.constant 0 : index
    %8 = vector.load %arg4[%c0_6, %c0_7] : memref<32x128xf32, #tpu.memory_space<vmem>>, vector<32x128xf32>
    %cst_8 = arith.constant dense<0.000000e+00> : vector<2x128xf32>
    %9 = tpu.matmul %7, %8, %cst_8 {dimension_numbers = #tpu.dot_dimension_numbers<[1], [0], [0], [1], [0, 0, 1, 1], [], []>} : vector<2x32xf32>, vector<32x128xf32>, vector<2x128xf32> -> vector<2x128xf32>
    %c0_9 = arith.constant 0 : index
    %c0_10 = arith.constant 0 : index
    %10 = vector.load %arg5[%c0_9, %c0_10] : memref<1x128xf32, #tpu.memory_space<vmem>>, vector<1x128xf32>
    %11 = vector.broadcast %10 : vector<1x128xf32> to vector<2x128xf32>
    %12 = arith.addf %9, %11 : vector<2x128xf32>
    %c0_11 = arith.constant 0 : index
    %c0_12 = arith.constant 0 : index
    %13 = vector.load %arg6[%c0_11, %c0_12] : memref<2x128xf32, #tpu.memory_space<vmem>>, vector<2x128xf32>
    tpu.vector_store %arg6[%c0_11, %c0_12], %12 {strides = array<i32>} : memref<2x128xf32, #tpu.memory_space<vmem>>, vector<2x128xf32>,
    return
  }
  func.func @transform_0(%arg0: i32) -> (i32, i32) {
    %c0_i32 = arith.constant 0 : i32
    %c0_i32_0 = arith.constant 0 : i32
    return %arg0, %c0_i32 : i32, i32
  }
  func.func @transform_1(%arg0: i32) -> (i32, i32) {
    %c0_i32 = arith.constant 0 : i32
    %c0_i32_0 = arith.constant 0 : i32
    %c0_i32_1 = arith.constant 0 : i32
    return %c0_i32, %c0_i32_0 : i32, i32
  }
  func.func @transform_2(%arg0: i32) -> (i32, i32) {
    %c0_i32 = arith.constant 0 : i32
    %c0_i32_0 = arith.constant 0 : i32
    %c0_i32_1 = arith.constant 0 : i32
    return %c0_i32, %c0_i32_0 : i32, i32
  }
  func.func @transform_3(%arg0: i32) -> (i32, i32) {
    %c0_i32 = arith.constant 0 : i32
    %c0_i32_0 = arith.constant 0 : i32
    %c0_i32_1 = arith.constant 0 : i32
    return %c0_i32, %c0_i32_0 : i32, i32
  }
  func.func @transform_4(%arg0: i32) -> (i32, i32) {
    %c0_i32 = arith.constant 0 : i32
    %c0_i32_0 = arith.constant 0 : i32
    %c0_i32_1 = arith.constant 0 : i32
    return %c0_i32, %c0_i32_0 : i32, i32
  }
  func.func @transform_5(%arg0: i32) -> (i32, i32) {
    %c0_i32 = arith.constant 0 : i32
    %c0_i32_0 = arith.constant 0 : i32
    return %arg0, %c0_i32 : i32, i32
  }
}

</mosaic_0001>

<llo_original>
// kernel: tpu_custom_call.1
$region0: #{tpu_custom_call.1}
  #allocation0 [shape = 'u32[]', space=smem, size = 0x4, offset = 0x4, fixed_abs, tag = 'smem constant byte address 0x4 - core index']
  #allocation1 [shape = 'u32[144,128]{1,0:T(1,128)}', space=vmem, size = 0x12000, scoped, tag = 'internal scratch']
  %s0 = inlined_call_operand.hbm [shape: f32[2,32], index: 0, kind: input, shape index: {}]
  %s1 = inlined_call_operand.hbm [shape: f32[32,32], index: 1, kind: input, shape index: {}]
  %s2 = inlined_call_operand.vmem [shape: f32[1,32], index: 2, kind: input, shape index: {}]
  %s3 = inlined_call_operand.hbm [shape: f32[32,128], index: 3, kind: input, shape index: {}]
  %s4 = inlined_call_operand.vmem [shape: f32[1,128], index: 4, kind: input, shape index: {}]
  %s5 = inlined_call_operand.hbm [shape: f32[2,128], index: 5, kind: output, shape index: {}]
  %s6 = sld [smem:[#allocation0]]
  $region42: #{tpu_custom_call.1} parent=0
    _
  %s8 = ssub.s32 1, %s6
  %s9 = scalar_select 0, %s8, %s6
  $region1: #{tpu_custom_call.1} parent=0
    #allocation2 [shape = 'u8[1024]{0}', space=vmem, size = 0x400, scoped, tag = 'input window, operand 0, single buffered']
    #allocation3 [shape = 's32[1]{0}', space=sflag, size = 0x4, scoped, tag = 'scoped memory for tpu_custom_call.1']
    #allocation4 [shape = 's32[1]{0}', space=sflag, size = 0x4, scoped, tag = 'scoped memory for tpu_custom_call.1']
    #allocation5 [shape = 'u8[16384]{0}', space=vmem, size = 0x4000, scoped, tag = 'input window, operand 1, single buffered']
    #allocation6 [shape = 's32[1]{0}', space=sflag, size = 0x4, scoped, tag = 'scoped memory for tpu_custom_call.1']
    #allocation7 [shape = 'u8[16384]{0}', space=vmem, size = 0x4000, scoped, tag = 'input window, operand 3, single buffered']
    #allocation8 [shape = 'u8[1024]{0}', space=vmem, size = 0x400, scoped, tag = 'output window, operand 0, single buffered']
    %10 = vsyncpa [#allocation3], 0
    %11 = vsyncpa [#allocation6], 0
    %12 = vsyncpa [#allocation4], 0
    // Predicated region
    $region2: #{tpu_custom_call.1} parent=1 // pred_check
      _
    $region3: #{tpu_custom_call.1} parent=1 // pred_check_branch
      %14 = sbr.rel (0) target = $region5
    $region4: #{tpu_custom_call.1} parent=1 // pred_region
      %s16 = ssub.s32 32, 32
      %17 = vsyncadd [#allocation3], %s16
      %s19 = sshll.u32 [#allocation2], 4
      %s20 = int_to_ptr.vmem [resolvable:$true] %s19
      %22 = dma.hbm_to_vmem [thread:$0]  %s0, 32, %s20, [#allocation3]
    $region5: #{tpu_custom_call.1} parent=1 // pred_fallthru
      _
    // Predicated region
    $region6: #{tpu_custom_call.1} parent=1 // pred_check
      _
    $region7: #{tpu_custom_call.1} parent=1 // pred_check_branch
      %24 = sbr.rel (0) target = $region9
    $region8: #{tpu_custom_call.1} parent=1 // pred_region
      %s26 = ssub.s32 512, 512
      %27 = vsyncadd [#allocation6], %s26
      %s28 = sshll.u32 [#allocation5], 4
      %s29 = int_to_ptr.vmem [resolvable:$true] %s28
      %34 = dma.hbm_to_vmem [thread:$0]  %s1, 512, %s29, [#allocation6], 128, 128, 8
    $region9: #{tpu_custom_call.1} parent=1 // pred_fallthru
      _
    // Predicated region
    $region10: #{tpu_custom_call.1} parent=1 // pred_check
      _
    $region11: #{tpu_custom_call.1} parent=1 // pred_check_branch
      %36 = sbr.rel (0) target = $region13
    $region12: #{tpu_custom_call.1} parent=1 // pred_region
      _
    $region13: #{tpu_custom_call.1} parent=1 // pred_fallthru
      _
    // Predicated region
    $region14: #{tpu_custom_call.1} parent=1 // pred_check
      _
    $region15: #{tpu_custom_call.1} parent=1 // pred_check_branch
      %38 = sbr.rel (0) target = $region17
    $region16: #{tpu_custom_call.1} parent=1 // pred_region
      %s40 = ssub.s32 512, 512
      %41 = vsyncadd [#allocation6], %s40
      %s42 = sshll.u32 [#allocation7], 4
      %s43 = int_to_ptr.vmem [resolvable:$true] %s42
      %48 = dma.hbm_to_vmem [thread:$0]  %s3, 512, %s43, [#allocation6], 128, 128, 8
    $region17: #{tpu_custom_call.1} parent=1 // pred_fallthru
      _
    // Predicated region
    $region18: #{tpu_custom_call.1} parent=1 // pred_check
      _
    $region19: #{tpu_custom_call.1} parent=1 // pred_check_branch
      %50 = sbr.rel (0) target = $region21
    $region20: #{tpu_custom_call.1} parent=1 // pred_region
      _
    $region21: #{tpu_custom_call.1} parent=1 // pred_fallthru
      _
    // Predicated region
    $region22: #{tpu_custom_call.1} parent=1 // pred_check
      _
    $region23: #{tpu_custom_call.1} parent=1 // pred_check_branch
      %52 = sbr.rel (0) target = $region25
    $region24: #{tpu_custom_call.1} parent=1 // pred_region
      %53 = dma.done [#allocation3], 32
    $region25: #{tpu_custom_call.1} parent=1 // pred_fallthru
      _
    // Predicated region
    $region26: #{tpu_custom_call.1} parent=1 // pred_check
      _
    $region27: #{tpu_custom_call.1} parent=1 // pred_check_branch
      %55 = sbr.rel (0) target = $region29
    $region28: #{tpu_custom_call.1} parent=1 // pred_region
      %56 = dma.done [#allocation6], 512
    $region29: #{tpu_custom_call.1} parent=1 // pred_fallthru
      _
    // Predicated region
    $region30: #{tpu_custom_call.1} parent=1 // pred_check
      _
    $region31: #{tpu_custom_call.1} parent=1 // pred_check_branch
      %58 = sbr.rel (0) target = $region33
    $region32: #{tpu_custom_call.1} parent=1 // pred_region
      %59 = dma.done [#allocation6], 512
    $region33: #{tpu_custom_call.1} parent=1 // pred_fallthru
      _
    %v60 = vld [vmem:[#allocation2] sm:$0x3]
    %v61 = vld [vmem:[#allocation5] sm:$0xff]
    %v62 = vld [vmem:[#allocation5 + $0x8] sm:$0xff]
    %v63 = vld [vmem:[#allocation5 + $0x10] sm:$0xff]
    %v64 = vld [vmem:[#allocation5 + $0x18] sm:$0xff]
    %v65 = vld [vmem:[%s2] sm:$0x1]
    %v67 = vlaneseq
    %v68 = vshrl.u32 %v67, 7
    %v69 = vsub.s32 0, %v68
    %v70 = vrot.slane %v65, %v69
    %vm72 = vcmask 261120
    %v74 = vsel %vm72, %v60, 0
    %76 = vmatprep.subr.mxu0 0.0
    %77 = vmatpush1.msra.mxu0 %v61
    %78 = vmatprep.subr.mxu0 0.0
    %79 = vmatpush1.msra.mxu0 %v62
    %80 = vmatprep.subr.mxu0 0.0
    %81 = vmatpush1.msra.mxu0 %v63
    %82 = vmatprep.subr.mxu0 0.0
    %83 = vmatpush1.msra.mxu0 %v64
    %84 = vmatprep.subr.mxu0 0.0
    %85 = vmatpush1.msra.mxu0 0.0
    %86 = vmatprep.subr.mxu0 0.0
    %87 = vmatpush1.msra.mxu0 0.0
    %88 = vmatprep.subr.mxu0 0.0
    %89 = vmatpush1.msra.mxu0 0.0
    %90 = vmatprep.subr.mxu0 0.0
    %91 = vmatpush1.msra.mxu0 0.0
    %92 = vmatprep.subr.mxu0 0.0
    %93 = vmatpush1.msra.mxu0 0.0
    %94 = vmatprep.subr.mxu0 0.0
    %95 = vmatpush1.msra.mxu0 0.0
    %96 = vmatprep.subr.mxu0 0.0
    %97 = vmatpush1.msra.mxu0 0.0
    %98 = vmatprep.subr.mxu0 0.0
    %99 = vmatpush1.msra.mxu0 0.0
    %100 = vmatprep.subr.mxu0 0.0
    %101 = vmatpush1.msra.mxu0 0.0
    %102 = vmatprep.subr.mxu0 0.0
    %103 = vmatpush1.msra.mxu0 0.0
    %104 = vmatprep.subr.mxu0 0.0
    %105 = vmatpush1.msra.mxu0 0.0
    %106 = vmatprep.subr.mxu0 0.0
    %107 = vmatpush1.msra.mxu0 0.0
    %108 = vmatprep.subr.mxu0 0.0
    %109 = vmatpush1.msra.mxu0 0.0
    %110 = vmatprep.subr.mxu0 0.0
    %111 = vmatpush1.msra.mxu0 0.0
    %112 = vmatprep.subr.mxu0 0.0
    %113 = vmatpush1.msra.mxu0 0.0
    %114 = vmatprep.subr.mxu0 0.0
    %115 = vmatpush1.msra.mxu0 0.0
    %116 = vmatprep.subr.mxu0 0.0
    %117 = vmatpush1.msra.mxu0 0.0
    %118 = vmatprep.subr.mxu0 0.0
    %119 = vmatpush1.msra.mxu0 0.0
    %120 = vmatprep.subr.mxu0 0.0
    %121 = vmatpush1.msra.mxu0 0.0
    %122 = vmatprep.subr.mxu0 0.0
    %123 = vmatpush1.msra.mxu0 0.0
    %124 = vmatprep.subr.mxu0 0.0
    %125 = vmatpush1.msra.mxu0 0.0
    %126 = vmatprep.subr.mxu0 0.0
    %127 = vmatpush1.msra.mxu0 0.0
    %128 = vmatprep.subr.mxu0 0.0
    %129 = vmatpush1.msra.mxu0 0.0
    %130 = vmatprep.subr.mxu0 0.0
    %131 = vmatpush1.msra.mxu0 0.0
    %132 = vmatprep.subr.mxu0 0.0
    %133 = vmatpush1.msra.mxu0 0.0
    %134 = vmatprep.subr.mxu0 0.0
    %135 = vmatpush1.msra.mxu0 0.0
    %136 = vmatprep.subr.mxu0 0.0
    %137 = vmatpush1.msra.mxu0 0.0
    %138 = vmatprep.subr.mxu0 0.0
    %139 = vmatpush1.msra.mxu0 0.0
    %140 = vmatprep.mubr.f32.mxu0 0.0
    %141 = vmatmul.mubr.f32.gmra.mrb[0].mxu0 %v74
    %v142 = vpop.f32.mrb[0].mxu0
    %v143 = vadd.f32 %v70, %v142
    %v144 = vpop.f32.mrb[0].mxu0
    %145 = vdwg.mxu0
    %v146 = vmax.f32 %v143, 0.0
    %v147 = vld [vmem:[#allocation7] sm:$0xff]
    %v148 = vld [vmem:[#allocation7 + $0x8] sm:$0xff]
    %v149 = vld [vmem:[#allocation7 + $0x10] sm:$0xff]
    %v150 = vld [vmem:[#allocation7 + $0x18] sm:$0xff]
    %v151 = vld [vmem:[%s4] sm:$0x1]
    %v153 = vlaneseq
    %v154 = vshrl.u32 %v153, 7
    %v155 = vsub.s32 0, %v154
    %v156 = vrot.slane %v151, %v155
    %v159 = vsel %vm72, %v146, 0
    %161 = vmatprep.subr.mxu0 0.0
    %162 = vmatpush1.msra.mxu0 %v147
    %163 = vmatprep.subr.mxu0 0.0
    %164 = vmatpush1.msra.mxu0 %v148
    %165 = vmatprep.subr.mxu0 0.0
    %166 = vmatpush1.msra.mxu0 %v149
    %167 = vmatprep.subr.mxu0 0.0
    %168 = vmatpush1.msra.mxu0 %v150
    %169 = vmatprep.subr.mxu0 0.0
    %170 = vmatpush1.msra.mxu0 0.0
    %171 = vmatprep.subr.mxu0 0.0
    %172 = vmatpush1.msra.mxu0 0.0
    %173 = vmatprep.subr.mxu0 0.0
    %174 = vmatpush1.msra.mxu0 0.0
    %175 = vmatprep.subr.mxu0 0.0
    %176 = vmatpush1.msra.mxu0 0.0
    %177 = vmatprep.subr.mxu0 0.0
    %178 = vmatpush1.msra.mxu0 0.0
    %179 = vmatprep.subr.mxu0 0.0
    %180 = vmatpush1.msra.mxu0 0.0
    %181 = vmatprep.subr.mxu0 0.0
    %182 = vmatpush1.msra.mxu0 0.0
    %183 = vmatprep.subr.mxu0 0.0
    %184 = vmatpush1.msra.mxu0 0.0
    %185 = vmatprep.subr.mxu0 0.0
    %186 = vmatpush1.msra.mxu0 0.0
    %187 = vmatprep.subr.mxu0 0.0
    %188 = vmatpush1.msra.mxu0 0.0
    %189 = vmatprep.subr.mxu0 0.0
    %190 = vmatpush1.msra.mxu0 0.0
    %191 = vmatprep.subr.mxu0 0.0
    %192 = vmatpush1.msra.mxu0 0.0
    %193 = vmatprep.subr.mxu0 0.0
    %194 = vmatpush1.msra.mxu0 0.0
    %195 = vmatprep.subr.mxu0 0.0
    %196 = vmatpush1.msra.mxu0 0.0
    %197 = vmatprep.subr.mxu0 0.0
    %198 = vmatpush1.msra.mxu0 0.0
    %199 = vmatprep.subr.mxu0 0.0
    %200 = vmatpush1.msra.mxu0 0.0
    %201 = vmatprep.subr.mxu0 0.0
    %202 = vmatpush1.msra.mxu0 0.0
    %203 = vmatprep.subr.mxu0 0.0
    %204 = vmatpush1.msra.mxu0 0.0
    %205 = vmatprep.subr.mxu0 0.0
    %206 = vmatpush1.msra.mxu0 0.0
    %207 = vmatprep.subr.mxu0 0.0
    %208 = vmatpush1.msra.mxu0 0.0
    %209 = vmatprep.subr.mxu0 0.0
    %210 = vmatpush1.msra.mxu0 0.0
    %211 = vmatprep.subr.mxu0 0.0
    %212 = vmatpush1.msra.mxu0 0.0
    %213 = vmatprep.subr.mxu0 0.0
    %214 = vmatpush1.msra.mxu0 0.0
    %215 = vmatprep.subr.mxu0 0.0
    %216 = vmatpush1.msra.mxu0 0.0
    %217 = vmatprep.subr.mxu0 0.0
    %218 = vmatpush1.msra.mxu0 0.0
    %219 = vmatprep.subr.mxu0 0.0
    %220 = vmatpush1.msra.mxu0 0.0
    %221 = vmatprep.subr.mxu0 0.0
    %222 = vmatpush1.msra.mxu0 0.0
    %223 = vmatprep.subr.mxu0 0.0
    %224 = vmatpush1.msra.mxu0 0.0
    %225 = vmatprep.mubr.f32.mxu0 0.0
    %226 = vmatmul.mubr.f32.gmra.mrb[0].mxu0 %v159
    %v227 = vpop.f32.mrb[0].mxu0
    %v228 = vadd.f32 %v156, %v227
    %v229 = vpop.f32.mrb[0].mxu0
    %230 = vdwg.mxu0
    %231 = vst [vmem:[#allocation8] sm:$0x3] %v228
    // Predicated region
    $region34: #{tpu_custom_call.1} parent=1 // pred_check
      _
    $region35: #{tpu_custom_call.1} parent=1 // pred_check_branch
      %233 = sbr.rel (0) target = $region37
    $region36: #{tpu_custom_call.1} parent=1 // pred_region
      %s235 = ssub.s32 32, 32
      %236 = vsyncadd [#allocation4], %s235
      %s238 = sshll.u32 [#allocation8], 4
      %s239 = int_to_ptr.vmem [resolvable:$true] %s238
      %241 = dma.vmem_to_hbm [thread:$0]  %s239, 32, %s5, [#allocation4]
    $region37: #{tpu_custom_call.1} parent=1 // pred_fallthru
      _
    // Predicated region
    $region38: #{tpu_custom_call.1} parent=1 // pred_check
      _
    $region39: #{tpu_custom_call.1} parent=1 // pred_check_branch
      %243 = sbr.rel (0) target = $region41
    $region40: #{tpu_custom_call.1} parent=1 // pred_region
      %244 = dma.done [#allocation4], 32
    $region41: #{tpu_custom_call.1} parent=1 // pred_fallthru
      _
    %245 = vsyncpa [#allocation3], 1
    %246 = vsyncpa [#allocation6], 1
    %247 = vsyncpa [#allocation4], 1

</llo_original>
